<compile_context>
chip_gen: v5e
topology: v5e:2x2
jax: 0.10.0
libtpu: 0.0.40
codegen_flags: <defaults>
</compile_context>

<pallas_src>
import jax
import jax.numpy as jnp
from jax.experimental import pallas as pl
from jax.experimental.pallas import tpu as pltpu


def _round_up(x, m):
    return ((x + m - 1) // m) * m


def _choose_tiling(B, max_tb=16384, min_steps=2):
    """Padding-aware batch tiling: returns (TB, B_pad, n_tiles)."""
    n_tiles = pl.cdiv(B, max_tb)
    if B > 128:
        # Force >=2 grid steps so the "parallel" batch axis shards across both
        # v7x TensorCores and the double buffer has something to pipeline.
        n_tiles = max(n_tiles, min_steps)
    TB = _round_up(pl.cdiv(B, n_tiles), 128)
    TB = min(TB, _round_up(max_tb, 128))
    n_tiles = pl.cdiv(B, TB)
    if B > 128:
        n_tiles = max(n_tiles, min_steps)
    return TB, n_tiles * TB, n_tiles


def perturbator_kernel(x_ref, w1_ref, w2_ref, b2_ref, y_ref, feat_ref):
    # x_ref:    (C+1, TB)  real channels + noise channel, batch on lanes
    # w1_ref:   (L,  C+1)  conv1 weight (out, in)
    # w2_ref:   (L+1, L)   conv2 weight (out, in); row L = mean over out-channels
    # b2_ref:   (L+1, 1)   conv2 bias; element L = mean(bias)
    # y_ref:    (L,  TB)
    # feat_ref: (1,  TB)
    x = x_ref[...]
    w1 = w1_ref[...]

    # First layer: tiny K = C+1 contraction as unrolled VPU outer-product FMAs.
    # h[l, b] = sum_c w1[l, c] * x[c, b]
    h = w1[:, 0:1] * x[0:1, :]
    for c in range(1, x_ref.shape[0]):            # static, small (C+1)
        h = h + w1[:, c:c + 1] * x[c:c + 1, :]
    h = jnp.maximum(h, 0.0)                        # ReLU

    # Second layer (+ folded feature mean) on the MXU:
    # (L+1, L) @ (L, TB) with f32 accumulation.
    out = jnp.dot(w2_ref[...], h, preferred_element_type=jnp.float32) + b2_ref[...]

    L = y_ref.shape[0]
    y_ref[...] = out[:L, :].astype(y_ref.dtype)
    feat_ref[...] = out[L:, :].astype(feat_ref.dtype)


def perturbator_forward(x, w1, w2, b2, noise, *, max_block_b=16384,
                        transpose_output=True):
    """x: (B, C); noise: (B, 1); w1: (C+1, L) (in, out); w2: (L, L) (in, out); b2: (L,).

    Note the (in, out) weight convention (PyTorch Conv1d stores (out, in, 1)).
    Returns (y, features): y is (B, L) when transpose_output=True (PyTorch
    layout, costs one extra XLA transpose pass), else the lane-dense (L, B).
    """
    B, C = x.shape
    Cin, L = w1.shape
    assert Cin == C + 1, f"w1 must be (C+1, L)=( {C + 1}, L ), got {w1.shape}"
    assert w2.shape == (L, L), f"w2 must be (L, L), got {w2.shape}"
    assert b2.shape == (L,), f"b2 must be (L,), got {b2.shape}"
    assert noise.shape == (B, 1), f"noise must be (B, 1), got {noise.shape}"

    TB, B_pad, n_tiles = _choose_tiling(B, max_tb=max_block_b)

    # Combined, padded, lane-dense input slab: channels on sublanes, batch on
    # lanes.  Noise is folded in for free since x is copied for pad+transpose.
    x_aug = jnp.concatenate([x.astype(jnp.float32), noise.astype(jnp.float32)],
                            axis=1)                                   # (B, C+1)
    x_aug_t = jnp.pad(x_aug.T, ((0, 0), (0, B_pad - B)))              # (C+1, B_pad)

    # Weights prepared once, outside the kernel.
    w1_t = w1.T.astype(jnp.float32)                                   # (L, C+1)
    w2_t = w2.T.astype(jnp.float32)                                   # (L, L) (out, in)
    # Fold the feature mean into an extra output row / bias element.
    w2_aug = jnp.concatenate(
        [w2_t, jnp.mean(w2_t, axis=0, keepdims=True)], axis=0)        # (L+1, L)
    b2_aug = jnp.concatenate(
        [b2.astype(jnp.float32), jnp.mean(b2, keepdims=True).astype(jnp.float32)]
    ).reshape(L + 1, 1)                                               # (L+1, 1)

    def batch_spec(rows):
        return pl.BlockSpec((rows, TB), lambda i: (0, i))

    def const_spec(shape):
        return pl.BlockSpec(shape, lambda i: (0, 0))

    y_t, feat_t = pl.pallas_call(
        perturbator_kernel,
        out_shape=(
            jax.ShapeDtypeStruct((L, B_pad), jnp.float32),
            jax.ShapeDtypeStruct((1, B_pad), jnp.float32),
        ),
        grid_spec=pltpu.PrefetchScalarGridSpec(
            num_scalar_prefetch=0,
            grid=(n_tiles,),
            in_specs=[
                batch_spec(C + 1),          # x_aug_t (batch-tiled)
                const_spec((L, C + 1)),     # w1_t   (resident across the grid)
                const_spec((L + 1, L)),     # w2_aug
                const_spec((L + 1, 1)),     # b2_aug
            ],
            out_specs=[batch_spec(L), batch_spec(1)],
        ),
        compiler_params=pltpu.CompilerParams(
            dimension_semantics=("parallel",),      # megacore-shard batch on v7x
            vmem_limit_bytes=32 * 1024 * 1024,      # headroom for large tiles (v5e default is 16 MiB)
        ),
        cost_estimate=pl.CostEstimate(
            flops=2 * B_pad * ((C + 1) * L + L * (L + 1)),
            transcendentals=0,
            bytes_accessed=4 * (B_pad * (C + 1)                       # input
                                + B_pad * (L + 1)                     # outputs
                                + (C + 1) * L + (L + 1) * L + (L + 1)),  # weights
        ),
    )(x_aug_t, w1_t, w2_aug, b2_aug)

    feat = feat_t[0, :B]                    # (B,)
    if transpose_output:
        y = y_t[:, :B].T                    # (B, L): PyTorch-facing layout (extra HBM pass)
    else:
        y = y_t[:, :B]                      # (L, B): lane-dense, no extra traffic
    return y, feat


def reference_forward(x, w1, w2, b2, noise):
    x_aug = jnp.concatenate([x, noise], axis=1)
    h = jnp.maximum(x_aug @ w1, 0.0)
    y = h @ w2 + b2[None, :]
    return y, jnp.mean(y, axis=-1)


if __name__ == "__main__":
    num_channels = 3
    latent_dim = 24

    key = jax.random.PRNGKey(0)
    k_x, k_noise, k_w1, k_w2, k_b2, k_x2, k_n2 = jax.random.split(key, 7)

    # Deterministic synthetic params (PyTorch conv weight (out, in, 1) is
    # stored here as (in, out)).
    w1 = jax.random.normal(k_w1, (num_channels + 1, latent_dim), dtype=jnp.float32) * 0.1
    w2 = jax.random.normal(k_w2, (latent_dim, latent_dim), dtype=jnp.float32) * 0.1
    b2 = jax.random.normal(k_b2, (latent_dim,), dtype=jnp.float32) * 0.1

    # TODO(synk): to match torch.rand exactly, the noise must be freshly sampled
    # per forward call (bound_multiplier=1); it is an explicit input here.

    # Case 1: tiny batch (single grid step).
    B = 8
    x = jax.random.normal(k_x, (B, num_channels), dtype=jnp.float32)
    noise = jax.random.uniform(k_noise, (B, 1), dtype=jnp.float32)
    y_pixels, features = perturbator_forward(x, w1, w2, b2, noise)
    jax.block_until_ready((y_pixels, features))
    y_ref, feat_ref = reference_forward(x, w1, w2, b2, noise)
    assert y_pixels.shape == (B, latent_dim)
    assert features.shape == (B,)
    assert jnp.allclose(y_pixels, y_ref, atol=1e-5, rtol=1e-5)
    assert jnp.allclose(features, feat_ref, atol=1e-5, rtol=1e-5)

    # Case 2: non-multiple-of-128 batch exercising the padded multi-step
    # (megacore) grid path.
    B2 = 300
    x2 = jax.random.normal(k_x2, (B2, num_channels), dtype=jnp.float32)
    noise2 = jax.random.uniform(k_n2, (B2, 1), dtype=jnp.float32)
    y2, feat2 = perturbator_forward(x2, w1, w2, b2, noise2)
    jax.block_until_ready((y2, feat2))
    y2_ref, f2_ref = reference_forward(x2, w1, w2, b2, noise2)
    assert y2.shape == (B2, latent_dim)
    assert feat2.shape == (B2,)
    assert jnp.allclose(y2, y2_ref, atol=1e-5, rtol=1e-5)
    assert jnp.allclose(feat2, f2_ref, atol=1e-5, rtol=1e-5)

    print("KERNEL_OK")
</pallas_src>

<mosaic_0001>
module attributes {stable_mosaic.version = 11 : i64} {
  func.func @perturbator_kernel(%arg0: i32, %arg1: memref<4x128xf32, #tpu.memory_space<vmem>>, %arg2: memref<24x4xf32, #tpu.memory_space<vmem>>, %arg3: memref<25x24xf32, #tpu.memory_space<vmem>>, %arg4: memref<25x1xf32, #tpu.memory_space<vmem>>, %arg5: memref<24x128xf32, #tpu.memory_space<vmem>>, %arg6: memref<1x128xf32, #tpu.memory_space<vmem>>) attributes {dimension_semantics = [#tpu.dimension_semantics<parallel>], iteration_bounds = array<i64: 1>, scalar_prefetch = 0 : i64, scratch_operands = 0 : i64, tpu.core_type = #tpu.core_type<tc>, window_params = [{transform_indices = @transform_0, window_bounds = array<i64: 4, 128>}, {pipeline_mode = #tpu.pipeline_mode<synchronous>, transform_indices = @transform_1, window_bounds = array<i64: 24, 4>}, {pipeline_mode = #tpu.pipeline_mode<synchronous>, transform_indices = @transform_2, window_bounds = array<i64: 25, 24>}, {pipeline_mode = #tpu.pipeline_mode<synchronous>, transform_indices = @transform_3, window_bounds = array<i64: 25, 1>}, {transform_indices = @transform_4, window_bounds = array<i64: 24, 128>}, {transform_indices = @transform_5, window_bounds = array<i64: 1, 128>}]} {
    %c0 = arith.constant 0 : index
    %c0_0 = arith.constant 0 : index
    %0 = vector.load %arg1[%c0, %c0_0] : memref<4x128xf32, #tpu.memory_space<vmem>>, vector<4x128xf32>
    %c0_1 = arith.constant 0 : index
    %c0_2 = arith.constant 0 : index
    %1 = vector.load %arg2[%c0_1, %c0_2] : memref<24x4xf32, #tpu.memory_space<vmem>>, vector<24x4xf32>
    %2 = vector.extract_strided_slice %1 {offsets = [0, 0], sizes = [24, 1], strides = [1, 1]} : vector<24x4xf32> to vector<24x1xf32>
    %3 = vector.extract_strided_slice %0 {offsets = [0, 0], sizes = [1, 128], strides = [1, 1]} : vector<4x128xf32> to vector<1x128xf32>
    %4 = vector.broadcast %2 : vector<24x1xf32> to vector<24x128xf32>
    %5 = vector.broadcast %3 : vector<1x128xf32> to vector<24x128xf32>
    %6 = arith.mulf %4, %5 : vector<24x128xf32>
    %7 = vector.extract_strided_slice %1 {offsets = [0, 1], sizes = [24, 1], strides = [1, 1]} : vector<24x4xf32> to vector<24x1xf32>
    %8 = vector.extract_strided_slice %0 {offsets = [1, 0], sizes = [1, 128], strides = [1, 1]} : vector<4x128xf32> to vector<1x128xf32>
    %9 = vector.broadcast %7 : vector<24x1xf32> to vector<24x128xf32>
    %10 = vector.broadcast %8 : vector<1x128xf32> to vector<24x128xf32>
    %11 = arith.mulf %9, %10 : vector<24x128xf32>
    %12 = arith.addf %6, %11 : vector<24x128xf32>
    %13 = vector.extract_strided_slice %1 {offsets = [0, 2], sizes = [24, 1], strides = [1, 1]} : vector<24x4xf32> to vector<24x1xf32>
    %14 = vector.extract_strided_slice %0 {offsets = [2, 0], sizes = [1, 128], strides = [1, 1]} : vector<4x128xf32> to vector<1x128xf32>
    %15 = vector.broadcast %13 : vector<24x1xf32> to vector<24x128xf32>
    %16 = vector.broadcast %14 : vector<1x128xf32> to vector<24x128xf32>
    %17 = arith.mulf %15, %16 : vector<24x128xf32>
    %18 = arith.addf %12, %17 : vector<24x128xf32>
    %19 = vector.extract_strided_slice %1 {offsets = [0, 3], sizes = [24, 1], strides = [1, 1]} : vector<24x4xf32> to vector<24x1xf32>
    %20 = vector.extract_strided_slice %0 {offsets = [3, 0], sizes = [1, 128], strides = [1, 1]} : vector<4x128xf32> to vector<1x128xf32>
    %21 = vector.broadcast %19 : vector<24x1xf32> to vector<24x128xf32>
    %22 = vector.broadcast %20 : vector<1x128xf32> to vector<24x128xf32>
    %23 = arith.mulf %21, %22 : vector<24x128xf32>
    %24 = arith.addf %18, %23 : vector<24x128xf32>
    %cst = arith.constant 0.000000e+00 : f32
    %25 = vector.broadcast %cst : f32 to vector<24x128xf32>
    %26 = arith.maximumf %24, %25 : vector<24x128xf32>
    %c0_3 = arith.constant 0 : index
    %c0_4 = arith.constant 0 : index
    %27 = vector.load %arg3[%c0_3, %c0_4] : memref<25x24xf32, #tpu.memory_space<vmem>>, vector<25x24xf32>
    %cst_5 = arith.constant dense<0.000000e+00> : vector<25x128xf32>
    %28 = tpu.matmul %27, %26, %cst_5 {dimension_numbers = #tpu.dot_dimension_numbers<[1], [0], [0], [1], [0, 0, 1, 1], [], []>} : vector<25x24xf32>, vector<24x128xf32>, vector<25x128xf32> -> vector<25x128xf32>
    %c0_6 = arith.constant 0 : index
    %c0_7 = arith.constant 0 : index
    %29 = vector.load %arg4[%c0_6, %c0_7] : memref<25x1xf32, #tpu.memory_space<vmem>>, vector<25x1xf32>
    %30 = vector.broadcast %29 : vector<25x1xf32> to vector<25x128xf32>
    %31 = arith.addf %28, %30 : vector<25x128xf32>
    %32 = vector.extract_strided_slice %31 {offsets = [0, 0], sizes = [24, 128], strides = [1, 1]} : vector<25x128xf32> to vector<24x128xf32>
    %c0_8 = arith.constant 0 : index
    %c0_9 = arith.constant 0 : index
    %33 = vector.load %arg5[%c0_8, %c0_9] : memref<24x128xf32, #tpu.memory_space<vmem>>, vector<24x128xf32>
    tpu.vector_store %arg5[%c0_8, %c0_9], %32 {strides = array<i32>} : memref<24x128xf32, #tpu.memory_space<vmem>>, vector<24x128xf32>,
    %34 = vector.extract_strided_slice %31 {offsets = [24, 0], sizes = [1, 128], strides = [1, 1]} : vector<25x128xf32> to vector<1x128xf32>
    %c0_10 = arith.constant 0 : index
    %c0_11 = arith.constant 0 : index
    %35 = vector.load %arg6[%c0_10, %c0_11] : memref<1x128xf32, #tpu.memory_space<vmem>>, vector<1x128xf32>
    tpu.vector_store %arg6[%c0_10, %c0_11], %34 {strides = array<i32>} : memref<1x128xf32, #tpu.memory_space<vmem>>, vector<1x128xf32>,
    return
  }
  func.func @transform_0(%arg0: i32) -> (i32, i32) {
    %c0_i32 = arith.constant 0 : i32
    %c0_i32_0 = arith.constant 0 : i32
    return %c0_i32, %arg0 : i32, i32
  }
  func.func @transform_1(%arg0: i32) -> (i32, i32) {
    %c0_i32 = arith.constant 0 : i32
    %c0_i32_0 = arith.constant 0 : i32
    %c0_i32_1 = arith.constant 0 : i32
    return %c0_i32, %c0_i32_0 : i32, i32
  }
  func.func @transform_2(%arg0: i32) -> (i32, i32) {
    %c0_i32 = arith.constant 0 : i32
    %c0_i32_0 = arith.constant 0 : i32
    %c0_i32_1 = arith.constant 0 : i32
    return %c0_i32, %c0_i32_0 : i32, i32
  }
  func.func @transform_3(%arg0: i32) -> (i32, i32) {
    %c0_i32 = arith.constant 0 : i32
    %c0_i32_0 = arith.constant 0 : i32
    %c0_i32_1 = arith.constant 0 : i32
    return %c0_i32, %c0_i32_0 : i32, i32
  }
  func.func @transform_4(%arg0: i32) -> (i32, i32) {
    %c0_i32 = arith.constant 0 : i32
    %c0_i32_0 = arith.constant 0 : i32
    return %c0_i32, %arg0 : i32, i32
  }
  func.func @transform_5(%arg0: i32) -> (i32, i32) {
    %c0_i32 = arith.constant 0 : i32
    %c0_i32_0 = arith.constant 0 : i32
    return %c0_i32, %arg0 : i32, i32
  }
}

</mosaic_0001>

<llo_original>
// kernel: tpu_custom_call.1
$region0: #{tpu_custom_call.1}
  #allocation0 [shape = 'u32[]', space=smem, size = 0x4, offset = 0x4, fixed_abs, tag = 'smem constant byte address 0x4 - core index']
  #allocation1 [shape = 'u32[72,128]{1,0:T(1,128)}', space=vmem, size = 0x9000, scoped, tag = 'internal scratch']
  %s0 = inlined_call_operand.vmem [shape: f32[4,128], index: 0, kind: input, shape index: {}]
  %s1 = inlined_call_operand.vmem [shape: f32[24,4], index: 1, kind: input, shape index: {}]
  %s2 = inlined_call_operand.vmem [shape: f32[25,24], index: 2, kind: input, shape index: {}]
  %s3 = inlined_call_operand.vmem [shape: f32[25,1], index: 3, kind: input, shape index: {}]
  %s4 = inlined_call_operand.hbm [shape: f32[24,128], index: 4, kind: output, shape index: {0}]
  %s5 = inlined_call_operand.hbm [shape: f32[1,128], index: 5, kind: output, shape index: {1}]
  %6 = xla_tuple %s4, %s5
  %s7 = sld [smem:[#allocation0]]
  $region34: #{tpu_custom_call.1} parent=0
    _
  %s9 = ssub.s32 1, %s7
  %s10 = scalar_select 0, %s9, %s7
  $region1: #{tpu_custom_call.1} parent=0
    #allocation2 [shape = 'u8[12288]{0}', space=vmem, size = 0x3000, scoped, tag = 'output window, operand 0, single buffered']
    #allocation3 [shape = 's32[1]{0}', space=sflag, size = 0x4, scoped, tag = 'scoped memory for tpu_custom_call.1']
    #allocation4 [shape = 'u8[512]{0}', space=vmem, size = 0x400, scoped, tag = 'output window, operand 1, single buffered']
    #allocation5 [shape = 's32[1]{0}', space=sflag, size = 0x4, scoped, tag = 'scoped memory for tpu_custom_call.1']
    %11 = vsyncpa [#allocation3], 0
    %12 = vsyncpa [#allocation5], 0
    // Predicated region
    $region2: #{tpu_custom_call.1} parent=1 // pred_check
      _
    $region3: #{tpu_custom_call.1} parent=1 // pred_check_branch
      %14 = sbr.rel (0) target = $region5
    $region4: #{tpu_custom_call.1} parent=1 // pred_region
      _
    $region5: #{tpu_custom_call.1} parent=1 // pred_fallthru
      _
    // Predicated region
    $region6: #{tpu_custom_call.1} parent=1 // pred_check
      _
    $region7: #{tpu_custom_call.1} parent=1 // pred_check_branch
      %16 = sbr.rel (0) target = $region9
    $region8: #{tpu_custom_call.1} parent=1 // pred_region
      _
    $region9: #{tpu_custom_call.1} parent=1 // pred_fallthru
      _
    // Predicated region
    $region10: #{tpu_custom_call.1} parent=1 // pred_check
      _
    $region11: #{tpu_custom_call.1} parent=1 // pred_check_branch
      %18 = sbr.rel (0) target = $region13
    $region12: #{tpu_custom_call.1} parent=1 // pred_region
      _
    $region13: #{tpu_custom_call.1} parent=1 // pred_fallthru
      _
    // Predicated region
    $region14: #{tpu_custom_call.1} parent=1 // pred_check
      _
    $region15: #{tpu_custom_call.1} parent=1 // pred_check_branch
      %20 = sbr.rel (0) target = $region17
    $region16: #{tpu_custom_call.1} parent=1 // pred_region
      _
    $region17: #{tpu_custom_call.1} parent=1 // pred_fallthru
      _
    %v21 = vld [vmem:[%s0] sm:$0xf]
    %v22 = vld [vmem:[%s1] sm:$0xff]
    %v23 = vld [vmem:[%s1 + $0x8] sm:$0xff]
    %v24 = vld [vmem:[%s1 + $0x10] sm:$0xff]
    %26 = vset.pattern.permute.xlu0 0
    %27 = vperm.xlu0 %26, %v22
    %v28 = vpop.permute.xlu0 %27
    %31 = vset.pattern.permute.xlu0 0
    %32 = vperm.xlu0 %31, %v23
    %v33 = vpop.permute.xlu0 %32
    %36 = vset.pattern.permute.xlu0 0
    %37 = vperm.xlu0 %36, %v24
    %v38 = vpop.permute.xlu0 %37
    %v40 = vperm.slane %v21, 0
    %v41 = vmul.f32 %v28, %v40
    %v42 = vmul.f32 %v33, %v40
    %v43 = vmul.f32 %v38, %v40
    %44 = vset.pattern.permute.xlu0 1
    %45 = vperm.xlu0 %44, %v22
    %v46 = vpop.permute.xlu0 %45
    %48 = vset.pattern.permute.xlu0 1
    %49 = vperm.xlu0 %48, %v23
    %v50 = vpop.permute.xlu0 %49
    %52 = vset.pattern.permute.xlu0 1
    %53 = vperm.xlu0 %52, %v24
    %v54 = vpop.permute.xlu0 %53
    %v56 = vperm.slane %v21, 1
    %v57 = vmul.f32 %v46, %v56
    %v58 = vmul.f32 %v50, %v56
    %v59 = vmul.f32 %v54, %v56
    %v60 = vadd.f32 %v41, %v57
    %v61 = vadd.f32 %v42, %v58
    %v62 = vadd.f32 %v43, %v59
    %63 = vset.pattern.permute.xlu0 2
    %64 = vperm.xlu0 %63, %v22
    %v65 = vpop.permute.xlu0 %64
    %67 = vset.pattern.permute.xlu0 2
    %68 = vperm.xlu0 %67, %v23
    %v69 = vpop.permute.xlu0 %68
    %71 = vset.pattern.permute.xlu0 2
    %72 = vperm.xlu0 %71, %v24
    %v73 = vpop.permute.xlu0 %72
    %v75 = vperm.slane %v21, 2
    %v76 = vmul.f32 %v65, %v75
    %v77 = vmul.f32 %v69, %v75
    %v78 = vmul.f32 %v73, %v75
    %v79 = vadd.f32 %v60, %v76
    %v80 = vadd.f32 %v61, %v77
    %v81 = vadd.f32 %v62, %v78
    %82 = vset.pattern.permute.xlu0 3
    %83 = vperm.xlu0 %82, %v22
    %v84 = vpop.permute.xlu0 %83
    %86 = vset.pattern.permute.xlu0 3
    %87 = vperm.xlu0 %86, %v23
    %v88 = vpop.permute.xlu0 %87
    %90 = vset.pattern.permute.xlu0 3
    %91 = vperm.xlu0 %90, %v24
    %v92 = vpop.permute.xlu0 %91
    %v94 = vperm.slane %v21, 3
    %v95 = vmul.f32 %v84, %v94
    %v96 = vmul.f32 %v88, %v94
    %v97 = vmul.f32 %v92, %v94
    %v98 = vadd.f32 %v79, %v95
    %v99 = vadd.f32 %v80, %v96
    %v100 = vadd.f32 %v81, %v97
    %v101 = vmax.f32 %v98, 0.0
    %v102 = vmax.f32 %v99, 0.0
    %v103 = vmax.f32 %v100, 0.0
    %v104 = vld [vmem:[%s2] sm:$0xff]
    %v105 = vld [vmem:[%s2 + $0x8] sm:$0xff]
    %v106 = vld [vmem:[%s2 + $0x10] sm:$0xff]
    %v107 = vld [vmem:[%s2 + $0x18] sm:$0x1]
    %v108 = vld [vmem:[%s3] sm:$0xff]
    %v109 = vld [vmem:[%s3 + $0x8] sm:$0xff]
    %v110 = vld [vmem:[%s3 + $0x10] sm:$0xff]
    %v111 = vld [vmem:[%s3 + $0x18] sm:$0x1]
    %113 = vset.pattern.permute.xlu0 0
    %114 = vperm.xlu0 %113, %v108
    %v115 = vpop.permute.xlu0 %114
    %118 = vset.pattern.permute.xlu0 0
    %119 = vperm.xlu0 %118, %v109
    %v120 = vpop.permute.xlu0 %119
    %123 = vset.pattern.permute.xlu0 0
    %124 = vperm.xlu0 %123, %v110
    %v125 = vpop.permute.xlu0 %124
    %128 = vset.pattern.permute.xlu0 0
    %129 = vperm.xlu0 %128, %v111
    %v130 = vpop.permute.xlu0 %129
    %vm132 = vcmask 195584
    %v134 = vsel %vm132, %v104, 0
    %v137 = vsel %vm132, %v105, 0
    %v140 = vsel %vm132, %v106, 0
    %v143 = vsel %vm132, %v107, 0
    %145 = vmatpush.msra.mxu0 0.0
    %146 = vmatpush.msra.mxu0 0.0
    %147 = vmatpush.msra.mxu0 0.0
    %148 = vmatpush.msra.mxu0 0.0
    %149 = vmatpush.msra.mxu0 0.0
    %150 = vmatpush.msra.mxu0 0.0
    %151 = vmatpush.msra.mxu0 0.0
    %152 = vmatpush.msra.mxu0 0.0
    %153 = vmatpush.msra.mxu0 0.0
    %154 = vmatpush.msra.mxu0 0.0
    %155 = vmatpush.msra.mxu0 0.0
    %156 = vmatpush.msra.mxu0 0.0
    %157 = vmatpush.msra.mxu0 0.0
    %158 = vmatpush.msra.mxu0 %v103
    %159 = vmatpush.msra.mxu0 %v102
    %160 = vmatpush.msra.mxu0 %v101
    %161 = vmatmul.f32.gmra.mxu0 %v134
    %v162 = vpop.f32.mrf.mxu0
    %v163 = vadd.f32 %v115, %v162
    %164 = vmatmul.f32.gmra.mxu0 %v137
    %v165 = vpop.f32.mrf.mxu0
    %v166 = vadd.f32 %v120, %v165
    %167 = vmatmul.f32.gmra.mxu0 %v140
    %v168 = vpop.f32.mrf.mxu0
    %v169 = vadd.f32 %v125, %v168
    %170 = vmatmul.f32.gmra.mxu0 %v143
    %v171 = vpop.f32.mrf.mxu0
    %v172 = vadd.f32 %v130, %v171
    %173 = vdwg.mxu0
    %174 = vst [vmem:[#allocation2] sm:$0xff] %v163
    %175 = vst [vmem:[#allocation2 + $0x8] sm:$0xff] %v166
    %176 = vst [vmem:[#allocation2 + $0x10] sm:$0xff] %v169
    %177 = vst [vmem:[#allocation4] sm:$0x1] %v172
    // Predicated region
    $region18: #{tpu_custom_call.1} parent=1 // pred_check
      _
    $region19: #{tpu_custom_call.1} parent=1 // pred_check_branch
      %179 = sbr.rel (0) target = $region21
    $region20: #{tpu_custom_call.1} parent=1 // pred_region
      %181 = vsyncadd [#allocation3], 0
      %s182 = sshll.u32 [#allocation2], 4
      %s183 = int_to_ptr.vmem [resolvable:$true] %s182
      %s184 = sshll.u32 %s4, 4
      %s185 = int_to_ptr.hbm [resolvable:$true] %s184
      %190 = dma.vmem_to_hbm [thread:$0]  %s183, 384, %s185, [#allocation3], 128, 128, 8
    $region21: #{tpu_custom_call.1} parent=1 // pred_fallthru
      _
    // Predicated region
    $region22: #{tpu_custom_call.1} parent=1 // pred_check
      _
    $region23: #{tpu_custom_call.1} parent=1 // pred_check_branch
      %192 = sbr.rel (0) target = $region25
    $region24: #{tpu_custom_call.1} parent=1 // pred_region
      %194 = vsyncadd [#allocation5], 0
      %s196 = sshll.u32 [#allocation4], 4
      %s197 = int_to_ptr.vmem [resolvable:$true] %s196
      %s198 = sshll.u32 %s5, 4
      %s199 = int_to_ptr.hbm [resolvable:$true] %s198
      %201 = dma.vmem_to_hbm [thread:$0]  %s197, 16, %s199, [#allocation5]
    $region25: #{tpu_custom_call.1} parent=1 // pred_fallthru
      _
    // Predicated region
    $region26: #{tpu_custom_call.1} parent=1 // pred_check
      _
    $region27: #{tpu_custom_call.1} parent=1 // pred_check_branch
      %203 = sbr.rel (0) target = $region29
    $region28: #{tpu_custom_call.1} parent=1 // pred_region
      %205 = dma.done [#allocation3], 384
    $region29: #{tpu_custom_call.1} parent=1 // pred_fallthru
      _
    // Predicated region
    $region30: #{tpu_custom_call.1} parent=1 // pred_check
      _
    $region31: #{tpu_custom_call.1} parent=1 // pred_check_branch
      %207 = sbr.rel (0) target = $region33
    $region32: #{tpu_custom_call.1} parent=1 // pred_region
      %209 = dma.done [#allocation5], 16
    $region33: #{tpu_custom_call.1} parent=1 // pred_fallthru
      _
    %210 = vsyncpa [#allocation3], 1
    %211 = vsyncpa [#allocation5], 1

</llo_original>
